<compile_context>
chip_gen: v7x
topology: tpu7x:2x2x1
jax: 0.10.0
libtpu: 0.0.40
codegen_flags: <defaults>
</compile_context>

<pallas_src>
import functools

import jax
import jax.numpy as jnp
from jax import lax
from jax.experimental import pallas as pl
from jax.experimental.pallas import tpu as pltpu


def _round_up(a, m):
    return (a + m - 1) // m * m


# ---------------------------------------------------------------------------
# Fused kernel: whole block-diagonal MLP for one batch tile.
# refs = (x_ref, w0_ref, b0_ref, ..., wL_ref, bL_ref, out_ref)
#   x_ref  : (B_tile, input_size)
#   wl_ref : (n_parallel, in_l, out_l)   -- diagonal blocks, pre-transposed
#   bl_ref : (n_parallel, out_l)
#   out_ref: (n_parallel, B_tile, output_size)
# ---------------------------------------------------------------------------
def _fused_block_mlp_kernel(*refs, num_linear):
    x_ref = refs[0]
    out_ref = refs[-1]
    wb_refs = refs[1:-1]

    n_parallel, b_tile, _ = out_ref.shape
    x = x_ref[...]
    # Virtual "x.repeat(1, n_parallel)": broadcast across the block axis
    # instead of materializing an n_parallel-times larger copy through HBM.
    h = jnp.broadcast_to(x[None, :, :], (n_parallel, b_tile, x.shape[-1]))

    for l in range(num_linear):            # small, static -> unrolled
        w = wb_refs[2 * l][...]            # (P, in_l, out_l)
        b = wb_refs[2 * l + 1][...]        # (P, out_l)
        h = lax.dot_general(
            h, w,
            dimension_numbers=(((2,), (1,)), ((0,), (0,))),  # batched over P
            preferred_element_type=jnp.float32,
        ) + b[:, None, :]
        if l != num_linear - 1:
            h = jnp.maximum(h, 0.0)

    out_ref[...] = h.astype(out_ref.dtype)


# ---------------------------------------------------------------------------
# Parameter construction (PyTorch-style dense masked weights, for reference)
# and one-time packing into block form (what the kernel actually consumes).
# ---------------------------------------------------------------------------
def init_block_diag_params(key, input_size, output_size, hid_size, num_layers,
                           n_parallel):
    p_in = n_parallel * input_size
    p_hid = n_parallel * hid_size
    p_out = n_parallel * output_size

    layer_dims = [(p_in, p_hid, input_size, hid_size)]
    for _ in range(num_layers - 1):
        layer_dims.append((p_hid, p_hid, hid_size, hid_size))
    layer_dims.append((p_hid, p_out, hid_size, output_size))

    params = []
    for fin, fout, bin_, bout in layer_dims:
        key, kw, kb = jax.random.split(key, 3)
        bound = 1.0 / float(fin) ** 0.5
        w = jax.random.uniform(kw, (fout, fin), jnp.float32, -bound, bound)
        b = jax.random.uniform(kb, (fout,), jnp.float32, -bound, bound)
        mask = jnp.zeros((fout, fin), jnp.float32)
        for p in range(n_parallel):
            mask = mask.at[p * bout:(p + 1) * bout,
                           p * bin_:(p + 1) * bin_].set(1.0)
        params.append((w * mask, b))
    return params


def pack_block_params(dense_params, n_parallel):
    """Extract only the diagonal blocks, pre-transposed to (P, in, out)."""
    block_params = []
    for w, b in dense_params:
        fout, fin = w.shape
        bout, bin_ = fout // n_parallel, fin // n_parallel
        w_blocks = jnp.stack(
            [w[p * bout:(p + 1) * bout, p * bin_:(p + 1) * bin_].T
             for p in range(n_parallel)], axis=0)          # (P, in, out)
        b_blocks = b.reshape(n_parallel, bout)              # (P, out)
        block_params.append((w_blocks, b_blocks))
    return block_params


# ---------------------------------------------------------------------------
# Forward pass wrapper.
# ---------------------------------------------------------------------------
def model_block_diag_forward(x, block_params, n_parallel, *, batch_tile=128):
    B, input_size = x.shape
    output_size = block_params[-1][0].shape[-1]

    # Returned per the module's forward contract (not used for compute).
    x_p = jnp.tile(x, (1, n_parallel))

    # Batch tiling: pad to a sublane multiple of 8, tile in multiples of 8.
    b_pad = _round_up(B, 8)
    b_tile = max(8, min(_round_up(batch_tile, 8), b_pad))
    b_pad = _round_up(b_pad, b_tile)
    x_pad = jnp.zeros((b_pad, input_size), x.dtype).at[:B].set(x)

    num_linear = len(block_params)
    kernel = functools.partial(_fused_block_mlp_kernel, num_linear=num_linear)

    in_specs = [pl.BlockSpec((b_tile, input_size), lambda i: (i, 0))]
    inputs = [x_pad]
    for w_blk, b_blk in block_params:
        # Constant index_map -> weights fetched once, VMEM-resident across grid.
        in_specs.append(pl.BlockSpec(w_blk.shape, lambda i: (0, 0, 0)))
        in_specs.append(pl.BlockSpec(b_blk.shape, lambda i: (0, 0)))
        inputs.append(w_blk)
        inputs.append(b_blk)

    out = pl.pallas_call(
        kernel,
        out_shape=jax.ShapeDtypeStruct((n_parallel, b_pad, output_size),
                                       jnp.float32),
        grid=(b_pad // b_tile,),
        in_specs=in_specs,
        out_specs=pl.BlockSpec((n_parallel, b_tile, output_size),
                               lambda i: (0, i, 0)),
        compiler_params=pltpu.CompilerParams(
            dimension_semantics=("parallel",),
        ),
    )(*inputs)

    # (P, B_pad, O) -> (B, P*O), matching PyTorch's block-diagonal column layout.
    y = jnp.transpose(out[:, :B, :], (1, 0, 2)).reshape(
        B, n_parallel * output_size)
    return {"output-parallel": y, "input-parallel": x_p}


# ---------------------------------------------------------------------------
# Demo / self-check.
# ---------------------------------------------------------------------------
if __name__ == "__main__":
    input_size = 8
    output_size = 4
    hid_size = 16
    num_layers = 2
    n_parallel = 4
    batch = 32

    key = jax.random.PRNGKey(0)
    key, kx = jax.random.split(key)
    x = jax.random.normal(kx, (batch, input_size), jnp.float32)

    dense_params = init_block_diag_params(
        key, input_size, output_size, hid_size, num_layers, n_parallel)
    block_params = pack_block_params(dense_params, n_parallel)

    out = model_block_diag_forward(x, block_params, n_parallel, batch_tile=8)
    jax.block_until_ready(out)

    # Reference: dense masked-weight forward in plain JAX (same math as PyTorch).
    def ref_forward(x, params):
        x_p = jnp.tile(x, (1, n_parallel))
        h = x_p
        for idx, (w, b) in enumerate(params):
            h = h @ w.T + b
            if idx != len(params) - 1:
                h = jnp.maximum(h, 0.0)
        return {"output-parallel": h, "input-parallel": x_p}

    ref = ref_forward(x, dense_params)
    assert out["output-parallel"].shape == (batch, n_parallel * output_size)
    assert out["input-parallel"].shape == (batch, n_parallel * input_size)
    assert jnp.allclose(out["output-parallel"], ref["output-parallel"],
                        atol=1e-4, rtol=1e-4)
    assert jnp.allclose(out["input-parallel"], ref["input-parallel"])

    print("KERNEL_OK")
</pallas_src>

<mosaic_0001>
module attributes {stable_mosaic.version = 11 : i64} {
  func.func @_fused_block_mlp_kernel(%arg0: i32, %arg1: memref<8x8xf32, #tpu.memory_space<vmem>>, %arg2: memref<4x8x16xf32, #tpu.memory_space<vmem>>, %arg3: memref<4x16xf32, #tpu.memory_space<vmem>>, %arg4: memref<4x16x16xf32, #tpu.memory_space<vmem>>, %arg5: memref<4x16xf32, #tpu.memory_space<vmem>>, %arg6: memref<4x16x4xf32, #tpu.memory_space<vmem>>, %arg7: memref<4x4xf32, #tpu.memory_space<vmem>>, %arg8: memref<4x8x4xf32, #tpu.memory_space<vmem>>) attributes {dimension_semantics = [#tpu.dimension_semantics<parallel>], iteration_bounds = array<i64: 4>, scalar_prefetch = 0 : i64, scratch_operands = 0 : i64, tpu.core_type = #tpu.core_type<tc>, window_params = [{transform_indices = @transform_0, window_bounds = array<i64: 8, 8>}, {pipeline_mode = #tpu.pipeline_mode<synchronous>, transform_indices = @transform_1, window_bounds = array<i64: 4, 8, 16>}, {pipeline_mode = #tpu.pipeline_mode<synchronous>, transform_indices = @transform_2, window_bounds = array<i64: 4, 16>}, {pipeline_mode = #tpu.pipeline_mode<synchronous>, transform_indices = @transform_3, window_bounds = array<i64: 4, 16, 16>}, {pipeline_mode = #tpu.pipeline_mode<synchronous>, transform_indices = @transform_4, window_bounds = array<i64: 4, 16>}, {pipeline_mode = #tpu.pipeline_mode<synchronous>, transform_indices = @transform_5, window_bounds = array<i64: 4, 16, 4>}, {pipeline_mode = #tpu.pipeline_mode<synchronous>, transform_indices = @transform_6, window_bounds = array<i64: 4, 4>}, {transform_indices = @transform_7, window_bounds = array<i64: 4, 8, 4>}]} {
    %c0 = arith.constant 0 : index
    %c0_0 = arith.constant 0 : index
    %0 = vector.load %arg1[%c0, %c0_0] : memref<8x8xf32, #tpu.memory_space<vmem>>, vector<8x8xf32>
    %1 = vector.shape_cast %0 : vector<8x8xf32> to vector<1x8x8xf32>
    %2 = vector.shape_cast %1 : vector<1x8x8xf32> to vector<1x8x8xf32>
    %3 = vector.broadcast %2 : vector<1x8x8xf32> to vector<4x8x8xf32>
    %c0_1 = arith.constant 0 : index
    %c0_2 = arith.constant 0 : index
    %c0_3 = arith.constant 0 : index
    %4 = vector.load %arg2[%c0_1, %c0_2, %c0_3] : memref<4x8x16xf32, #tpu.memory_space<vmem>>, vector<4x8x16xf32>
    %c0_4 = arith.constant 0 : index
    %c0_5 = arith.constant 0 : index
    %5 = vector.load %arg3[%c0_4, %c0_5] : memref<4x16xf32, #tpu.memory_space<vmem>>, vector<4x16xf32>
    %cst = arith.constant dense<0.000000e+00> : vector<4x8x16xf32>
    %6 = tpu.matmul %3, %4, %cst {dimension_numbers = #tpu.dot_dimension_numbers<[2], [1], [1], [2], [0, 0, 0, 1, 1, 2], [0], [0]>} : vector<4x8x8xf32>, vector<4x8x16xf32>, vector<4x8x16xf32> -> vector<4x8x16xf32>
    %7 = vector.shape_cast %5 : vector<4x16xf32> to vector<4x1x16xf32>
    %8 = vector.broadcast %7 : vector<4x1x16xf32> to vector<4x8x16xf32>
    %9 = arith.addf %6, %8 : vector<4x8x16xf32>
    %cst_6 = arith.constant 0.000000e+00 : f32
    %10 = vector.broadcast %cst_6 : f32 to vector<4x8x16xf32>
    %11 = arith.maximumf %9, %10 : vector<4x8x16xf32>
    %c0_7 = arith.constant 0 : index
    %c0_8 = arith.constant 0 : index
    %c0_9 = arith.constant 0 : index
    %12 = vector.load %arg4[%c0_7, %c0_8, %c0_9] : memref<4x16x16xf32, #tpu.memory_space<vmem>>, vector<4x16x16xf32>
    %c0_10 = arith.constant 0 : index
    %c0_11 = arith.constant 0 : index
    %13 = vector.load %arg5[%c0_10, %c0_11] : memref<4x16xf32, #tpu.memory_space<vmem>>, vector<4x16xf32>
    %cst_12 = arith.constant dense<0.000000e+00> : vector<4x8x16xf32>
    %14 = tpu.matmul %11, %12, %cst_12 {dimension_numbers = #tpu.dot_dimension_numbers<[2], [1], [1], [2], [0, 0, 0, 1, 1, 2], [0], [0]>} : vector<4x8x16xf32>, vector<4x16x16xf32>, vector<4x8x16xf32> -> vector<4x8x16xf32>
    %15 = vector.shape_cast %13 : vector<4x16xf32> to vector<4x1x16xf32>
    %16 = vector.broadcast %15 : vector<4x1x16xf32> to vector<4x8x16xf32>
    %17 = arith.addf %14, %16 : vector<4x8x16xf32>
    %cst_13 = arith.constant 0.000000e+00 : f32
    %18 = vector.broadcast %cst_13 : f32 to vector<4x8x16xf32>
    %19 = arith.maximumf %17, %18 : vector<4x8x16xf32>
    %c0_14 = arith.constant 0 : index
    %c0_15 = arith.constant 0 : index
    %c0_16 = arith.constant 0 : index
    %20 = vector.load %arg6[%c0_14, %c0_15, %c0_16] : memref<4x16x4xf32, #tpu.memory_space<vmem>>, vector<4x16x4xf32>
    %c0_17 = arith.constant 0 : index
    %c0_18 = arith.constant 0 : index
    %21 = vector.load %arg7[%c0_17, %c0_18] : memref<4x4xf32, #tpu.memory_space<vmem>>, vector<4x4xf32>
    %cst_19 = arith.constant dense<0.000000e+00> : vector<4x8x4xf32>
    %22 = tpu.matmul %19, %20, %cst_19 {dimension_numbers = #tpu.dot_dimension_numbers<[2], [1], [1], [2], [0, 0, 0, 1, 1, 2], [0], [0]>} : vector<4x8x16xf32>, vector<4x16x4xf32>, vector<4x8x4xf32> -> vector<4x8x4xf32>
    %23 = vector.shape_cast %21 : vector<4x4xf32> to vector<4x1x4xf32>
    %24 = vector.broadcast %23 : vector<4x1x4xf32> to vector<4x8x4xf32>
    %25 = arith.addf %22, %24 : vector<4x8x4xf32>
    %c0_20 = arith.constant 0 : index
    %c0_21 = arith.constant 0 : index
    %c0_22 = arith.constant 0 : index
    %26 = vector.load %arg8[%c0_20, %c0_21, %c0_22] : memref<4x8x4xf32, #tpu.memory_space<vmem>>, vector<4x8x4xf32>
    tpu.vector_store %arg8[%c0_20, %c0_21, %c0_22], %25 {strides = array<i32>} : memref<4x8x4xf32, #tpu.memory_space<vmem>>, vector<4x8x4xf32>,
    return
  }
  func.func @transform_0(%arg0: i32) -> (i32, i32) {
    %c0_i32 = arith.constant 0 : i32
    %c0_i32_0 = arith.constant 0 : i32
    return %arg0, %c0_i32 : i32, i32
  }
  func.func @transform_1(%arg0: i32) -> (i32, i32, i32) {
    %c0_i32 = arith.constant 0 : i32
    %c0_i32_0 = arith.constant 0 : i32
    %c0_i32_1 = arith.constant 0 : i32
    %c0_i32_2 = arith.constant 0 : i32
    return %c0_i32, %c0_i32_0, %c0_i32_1 : i32, i32, i32
  }
  func.func @transform_2(%arg0: i32) -> (i32, i32) {
    %c0_i32 = arith.constant 0 : i32
    %c0_i32_0 = arith.constant 0 : i32
    %c0_i32_1 = arith.constant 0 : i32
    return %c0_i32, %c0_i32_0 : i32, i32
  }
  func.func @transform_3(%arg0: i32) -> (i32, i32, i32) {
    %c0_i32 = arith.constant 0 : i32
    %c0_i32_0 = arith.constant 0 : i32
    %c0_i32_1 = arith.constant 0 : i32
    %c0_i32_2 = arith.constant 0 : i32
    return %c0_i32, %c0_i32_0, %c0_i32_1 : i32, i32, i32
  }
  func.func @transform_4(%arg0: i32) -> (i32, i32) {
    %c0_i32 = arith.constant 0 : i32
    %c0_i32_0 = arith.constant 0 : i32
    %c0_i32_1 = arith.constant 0 : i32
    return %c0_i32, %c0_i32_0 : i32, i32
  }
  func.func @transform_5(%arg0: i32) -> (i32, i32, i32) {
    %c0_i32 = arith.constant 0 : i32
    %c0_i32_0 = arith.constant 0 : i32
    %c0_i32_1 = arith.constant 0 : i32
    %c0_i32_2 = arith.constant 0 : i32
    return %c0_i32, %c0_i32_0, %c0_i32_1 : i32, i32, i32
  }
  func.func @transform_6(%arg0: i32) -> (i32, i32) {
    %c0_i32 = arith.constant 0 : i32
    %c0_i32_0 = arith.constant 0 : i32
    %c0_i32_1 = arith.constant 0 : i32
    return %c0_i32, %c0_i32_0 : i32, i32
  }
  func.func @transform_7(%arg0: i32) -> (i32, i32, i32) {
    %c0_i32 = arith.constant 0 : i32
    %c0_i32_0 = arith.constant 0 : i32
    %c0_i32_1 = arith.constant 0 : i32
    return %c0_i32, %arg0, %c0_i32_0 : i32, i32, i32
  }
}

</mosaic_0001>

<llo_original>
// kernel: tpu_custom_call.1
$region0: #{tpu_custom_call.1}
  #allocation0 [shape = 'u32[]', space=smem, size = 0x4, offset = 0x4, fixed_abs, tag = 'smem constant byte address 0x4 - core index']
  #allocation1 [shape = 'u32[144,128]{1,0:T(1,128)}', space=vmem, size = 0x12000, scoped, tag = 'internal scratch']
  %s0 = inlined_call_operand.vmem [shape: f32[32,8], index: 0, kind: input, shape index: {}]
  %s1 = inlined_call_operand.vmem [shape: f32[4,8,16], index: 1, kind: input, shape index: {}]
  %s2 = inlined_call_operand.vmem [shape: f32[4,16], index: 2, kind: input, shape index: {}]
  %s3 = inlined_call_operand.vmem [shape: f32[4,16,16], index: 3, kind: input, shape index: {}]
  %s4 = inlined_call_operand.vmem [shape: f32[4,16], index: 4, kind: input, shape index: {}]
  %s5 = inlined_call_operand.vmem [shape: f32[4,16,4], index: 5, kind: input, shape index: {}]
  %s6 = inlined_call_operand.vmem [shape: f32[4,4], index: 6, kind: input, shape index: {}]
  %s7 = inlined_call_operand.vmem [shape: f32[4,32,4], index: 7, kind: output, shape index: {}]
  %s8 = sld [smem:[#allocation0]]
  $region95: #{tpu_custom_call.1} parent=0
    _
  %s10 = ssub.s32 1, %s8
  %s11 = scalar_select 0, %s10, %s8
  $region1: #{tpu_custom_call.1} parent=0
    #allocation2 [shape = 'u8[32768]{0}', space=vmem, size = 0x8000, scoped, tag = 'output window, operand 0']
    loop: start=0, step=1, limit=6
    $region2: #{tpu_custom_call.1} parent=1 // loop_pre_header
      _
    $region3: #{tpu_custom_call.1} parent=1 // loop_header
      %s13 = sphi 0, %s17
      %p14 = scmp.ge.s32.totalorder %s13, 6
      %s23 = sphi 0, %s25
      %s26 = sphi 0, %s23
      %s27 = sphi 0, %s26
      %s43 = sphi 0, %s27
      %s47 = sphi 0, %s47
      %s49 = sphi 0, %s47
      %s50 = sphi 0, %s49
      %s64 = sphi 0, %s50
      %s68 = sphi 0, %s68
      %s70 = sphi 0, %s68
      %s71 = sphi 0, %s70
      %s85 = sphi 0, %s71
      %s89 = sphi 0, %s89
      %s91 = sphi 0, %s89
      %s92 = sphi 0, %s91
      %s106 = sphi 0, %s92
      %s110 = sphi 0, %s110
      %s112 = sphi 0, %s110
      %s113 = sphi 0, %s112
      %s127 = sphi 0, %s113
      %s131 = sphi 0, %s131
      %s133 = sphi 0, %s131
      %s134 = sphi 0, %s133
      %s148 = sphi 0, %s134
      %s152 = sphi 0, %s152
      %s154 = sphi 0, %s152
      %s155 = sphi 0, %s154
      %s169 = sphi 0, %s155
      %s175 = sphi 0, %s177
      %s178 = sphi 0, %s175
      %s179 = sphi 0, %s178
      %s195 = sphi 0, %s179
    $region4: #{tpu_custom_call.1} parent=1 // loop_header_branch
      %16 = sbr.rel (%p14) target = $region8
    $region5: #{tpu_custom_call.1} parent=1 // loop_body
      %s18 = ssub.s32 %s13, 1
      %s19 = ssub.s32 %s13, 2
      %s20 = sadd.s32 %s13, 1
      %s21 = ssub.s32 %s13, %s20
      %p22 = scmp.eq.s32.totalorder %s21, 0
      %s24 = sadd.s32 %s23, 1
      %s25 = scalar_select %p22, %s23, %s24
      %p28 = pneg %p22
      %p29 = scmp.eq.s32.totalorder %s13, 3
      %p30 = por %p28, %p29
      %p31 = scmp.ne.s32.totalorder %s23, %s26
      %p32 = scmp.eq.s32.totalorder %s13, 0
      %p33 = por %p31, %p32
      %p34 = scmp.ne.s32.totalorder %s23, %s26
      %p35 = scmp.eq.s32.totalorder %s18, 3
      %p36 = por %p34, %p35
      %p37 = scmp.ne.s32.totalorder %s26, %s27
      %p38 = scmp.eq.s32.totalorder %s18, 0
      %p39 = por %p37, %p38
      %p40 = scmp.ne.s32.totalorder %s26, %s27
      %p41 = scmp.eq.s32.totalorder %s19, 3
      %p42 = por %p40, %p41
      %p44 = scmp.ne.s32.totalorder %s27, %s43
      %p45 = scmp.eq.s32.totalorder %s19, 0
      %p46 = por %p44, %p45
      %s48 = sadd.s32 %s47, 1
      %p51 = scmp.eq.s32.totalorder %s13, 3
      %p52 = scmp.ne.s32.totalorder %s47, %s49
      %p53 = scmp.eq.s32.totalorder %s13, 0
      %p54 = por %p52, %p53
      %p55 = scmp.ne.s32.totalorder %s47, %s49
      %p56 = scmp.eq.s32.totalorder %s18, 3
      %p57 = por %p55, %p56
      %p58 = scmp.ne.s32.totalorder %s49, %s50
      %p59 = scmp.eq.s32.totalorder %s18, 0
      %p60 = por %p58, %p59
      %p61 = scmp.ne.s32.totalorder %s49, %s50
      %p62 = scmp.eq.s32.totalorder %s19, 3
      %p63 = por %p61, %p62
      %p65 = scmp.ne.s32.totalorder %s50, %s64
      %p66 = scmp.eq.s32.totalorder %s19, 0
      %p67 = por %p65, %p66
      %s69 = sadd.s32 %s68, 1
      %p72 = scmp.eq.s32.totalorder %s13, 3
      %p73 = scmp.ne.s32.totalorder %s68, %s70
      %p74 = scmp.eq.s32.totalorder %s13, 0
      %p75 = por %p73, %p74
      %p76 = scmp.ne.s32.totalorder %s68, %s70
      %p77 = scmp.eq.s32.totalorder %s18, 3
      %p78 = por %p76, %p77
      %p79 = scmp.ne.s32.totalorder %s70, %s71
      %p80 = scmp.eq.s32.totalorder %s18, 0
      %p81 = por %p79, %p80
      %p82 = scmp.ne.s32.totalorder %s70, %s71
      %p83 = scmp.eq.s32.totalorder %s19, 3
      %p84 = por %p82, %p83
      %p86 = scmp.ne.s32.totalorder %s71, %s85
      %p87 = scmp.eq.s32.totalorder %s19, 0
      %p88 = por %p86, %p87
      %s90 = sadd.s32 %s89, 1
      %p93 = scmp.eq.s32.totalorder %s13, 3
      %p94 = scmp.ne.s32.totalorder %s89, %s91
      %p95 = scmp.eq.s32.totalorder %s13, 0
      %p96 = por %p94, %p95
      %p97 = scmp.ne.s32.totalorder %s89, %s91
      %p98 = scmp.eq.s32.totalorder %s18, 3
      %p99 = por %p97, %p98
      %p100 = scmp.ne.s32.totalorder %s91, %s92
      %p101 = scmp.eq.s32.totalorder %s18, 0
      %p102 = por %p100, %p101
      %p103 = scmp.ne.s32.totalorder %s91, %s92
      %p104 = scmp.eq.s32.totalorder %s19, 3
      %p105 = por %p103, %p104
      %p107 = scmp.ne.s32.totalorder %s92, %s106
      %p108 = scmp.eq.s32.totalorder %s19, 0
      %p109 = por %p107, %p108
      %s111 = sadd.s32 %s110, 1
      %p114 = scmp.eq.s32.totalorder %s13, 3
      %p115 = scmp.ne.s32.totalorder %s110, %s112
      %p116 = scmp.eq.s32.totalorder %s13, 0
      %p117 = por %p115, %p116
      %p118 = scmp.ne.s32.totalorder %s110, %s112
      %p119 = scmp.eq.s32.totalorder %s18, 3
      %p120 = por %p118, %p119
      %p121 = scmp.ne.s32.totalorder %s112, %s113
      %p122 = scmp.eq.s32.totalorder %s18, 0
      %p123 = por %p121, %p122
      %p124 = scmp.ne.s32.totalorder %s112, %s113
      %p125 = scmp.eq.s32.totalorder %s19, 3
      %p126 = por %p124, %p125
      %p128 = scmp.ne.s32.totalorder %s113, %s127
      %p129 = scmp.eq.s32.totalorder %s19, 0
      %p130 = por %p128, %p129
      %s132 = sadd.s32 %s131, 1
      %p135 = scmp.eq.s32.totalorder %s13, 3
      %p136 = scmp.ne.s32.totalorder %s131, %s133
      %p137 = scmp.eq.s32.totalorder %s13, 0
      %p138 = por %p136, %p137
      %p139 = scmp.ne.s32.totalorder %s131, %s133
      %p140 = scmp.eq.s32.totalorder %s18, 3
      %p141 = por %p139, %p140
      %p142 = scmp.ne.s32.totalorder %s133, %s134
      %p143 = scmp.eq.s32.totalorder %s18, 0
      %p144 = por %p142, %p143
      %p145 = scmp.ne.s32.totalorder %s133, %s134
      %p146 = scmp.eq.s32.totalorder %s19, 3
      %p147 = por %p145, %p146
      %p149 = scmp.ne.s32.totalorder %s134, %s148
      %p150 = scmp.eq.s32.totalorder %s19, 0
      %p151 = por %p149, %p150
      %s153 = sadd.s32 %s152, 1
      %p156 = scmp.eq.s32.totalorder %s13, 3
      %p157 = scmp.ne.s32.totalorder %s152, %s154
      %p158 = scmp.eq.s32.totalorder %s13, 0
      %p159 = por %p157, %p158
      %p160 = scmp.ne.s32.totalorder %s152, %s154
      %p161 = scmp.eq.s32.totalorder %s18, 3
      %p162 = por %p160, %p161
      %p163 = scmp.ne.s32.totalorder %s154, %s155
      %p164 = scmp.eq.s32.totalorder %s18, 0
      %p165 = por %p163, %p164
      %p166 = scmp.ne.s32.totalorder %s154, %s155
      %p167 = scmp.eq.s32.totalorder %s19, 3
      %p168 = por %p166, %p167
      %p170 = scmp.ne.s32.totalorder %s155, %s169
      %p171 = scmp.eq.s32.totalorder %s19, 0
      %p172 = por %p170, %p171
      %s173 = ssub.s32 %s13, %s20
      %p174 = scmp.eq.s32.totalorder %s173, 0
      %s176 = sadd.s32 %s175, 1
      %s177 = scalar_select %p174, %s175, %s176
      %p180 = pneg %p174
      %p181 = scmp.eq.s32.totalorder %s13, 3
      %p182 = por %p180, %p181
      %p183 = scmp.ne.s32.totalorder %s175, %s178
      %p184 = scmp.eq.s32.totalorder %s13, 0
      %p185 = por %p183, %p184
      %p186 = scmp.ne.s32.totalorder %s175, %s178
      %p187 = scmp.eq.s32.totalorder %s18, 3
      %p188 = por %p186, %p187
      %p189 = scmp.ne.s32.totalorder %s178, %s179
      %p190 = scmp.eq.s32.totalorder %s18, 0
      %p191 = por %p189, %p190
      %p192 = scmp.ne.s32.totalorder %s178, %s179
      %p193 = scmp.eq.s32.totalorder %s19, 3
      %p194 = por %p192, %p193
      %p196 = scmp.ne.s32.totalorder %s179, %s195
      %p197 = scmp.eq.s32.totalorder %s19, 0
      %p198 = por %p196, %p197
      %p199 = scmp.le.s32.totalorder 1, %s13
      %p200 = scmp.lt.s32.totalorder %s13, 5
      %p201 = pnand %p199, %p200
      %p202 = pneg %p201
      // Predicated region
      $region9: #{tpu_custom_call.1} parent=5 // pred_check
        _
      $region10: #{tpu_custom_call.1} parent=5 // pred_check_branch
        %204 = sbr.rel (%p201) target = $region12
      $region11: #{tpu_custom_call.1} parent=5 // pred_region
        %s205 = ssub.s32 %s13, 1
        // Predicated region
        $region13: #{tpu_custom_call.1} parent=11 // pred_check
          %p206 = pneg %p60
        $region14: #{tpu_custom_call.1} parent=11 // pred_check_branch
          %208 = sbr.rel (%p206) target = $region16
        $region15: #{tpu_custom_call.1} parent=11 // pred_region
          _
        $region16: #{tpu_custom_call.1} parent=11 // pred_fallthru
          _
        // Predicated region
        $region17: #{tpu_custom_call.1} parent=11 // pred_check
          %p209 = pneg %p81
        $region18: #{tpu_custom_call.1} parent=11 // pred_check_branch
          %211 = sbr.rel (%p209) target = $region20
        $region19: #{tpu_custom_call.1} parent=11 // pred_region
          _
        $region20: #{tpu_custom_call.1} parent=11 // pred_fallthru
          _
        // Predicated region
        $region21: #{tpu_custom_call.1} parent=11 // pred_check
          %p212 = pneg %p102
        $region22: #{tpu_custom_call.1} parent=11 // pred_check_branch
          %214 = sbr.rel (%p212) target = $region24
        $region23: #{tpu_custom_call.1} parent=11 // pred_region
          _
        $region24: #{tpu_custom_call.1} parent=11 // pred_fallthru
          _
        // Predicated region
        $region25: #{tpu_custom_call.1} parent=11 // pred_check
          %p215 = pneg %p123
        $region26: #{tpu_custom_call.1} parent=11 // pred_check_branch
          %217 = sbr.rel (%p215) target = $region28
        $region27: #{tpu_custom_call.1} parent=11 // pred_region
          _
        $region28: #{tpu_custom_call.1} parent=11 // pred_fallthru
          _
        // Predicated region
        $region29: #{tpu_custom_call.1} parent=11 // pred_check
          %p218 = pneg %p144
        $region30: #{tpu_custom_call.1} parent=11 // pred_check_branch
          %220 = sbr.rel (%p218) target = $region32
        $region31: #{tpu_custom_call.1} parent=11 // pred_region
          _
        $region32: #{tpu_custom_call.1} parent=11 // pred_fallthru
          _
        // Predicated region
        $region33: #{tpu_custom_call.1} parent=11 // pred_check
          %p221 = pneg %p165
        $region34: #{tpu_custom_call.1} parent=11 // pred_check_branch
          %223 = sbr.rel (%p221) target = $region36
        $region35: #{tpu_custom_call.1} parent=11 // pred_region
          _
        $region36: #{tpu_custom_call.1} parent=11 // pred_fallthru
          _
      $region12: #{tpu_custom_call.1} parent=5 // pred_fallthru
        _
      %p224 = scmp.lt.s32.totalorder %s13, 4
      // Predicated region
      $region37: #{tpu_custom_call.1} parent=5 // pred_check
        %p225 = pneg %p224
      $region38: #{tpu_custom_call.1} parent=5 // pred_check_branch
        %227 = sbr.rel (%p225) target = $region40
      $region39: #{tpu_custom_call.1} parent=5 // pred_region
        // Predicated region
        $region41: #{tpu_custom_call.1} parent=39 // pred_check
          %p228 = pneg %p33
        $region42: #{tpu_custom_call.1} parent=39 // pred_check_branch
          %230 = sbr.rel (%p228) target = $region44
        $region43: #{tpu_custom_call.1} parent=39 // pred_region
          %p231 = scmp.lt.s32.totalorder %s13, 3
          %s232 = scalar_select %p231, %s13, 3
          %s233 = smul.addr %s232, 8
          %s234 = scalar_lea.vmem %s0, %s233
        $region44: #{tpu_custom_call.1} parent=39 // pred_fallthru
          _
      $region40: #{tpu_custom_call.1} parent=5 // pred_fallthru
        _
      %p235 = scmp.le.s32.totalorder 1, %s13
      %p236 = scmp.lt.s32.totalorder %s13, 5
      %p237 = pnand %p235, %p236
      %p238 = pneg %p237
      // Predicated region
      $region45: #{tpu_custom_call.1} parent=5 // pred_check
        _
      $region46: #{tpu_custom_call.1} parent=5 // pred_check_branch
        %240 = sbr.rel (%p237) target = $region48
      $region47: #{tpu_custom_call.1} parent=5 // pred_region
        %s241 = ssub.s32 %s13, 1
        %p242 = scmp.lt.s32.totalorder %s18, 3
        %s243 = scalar_select %p242, %s18, 3
        %s244 = smul.addr %s243, 8
        %s245 = scalar_lea.vmem %s0, %s244
        %p246 = pneg %p39
        %p247 = pneg %p36
        %p248 = pneg %p60
        %p249 = pneg %p57
        %p250 = pneg %p81
        %p251 = pneg %p78
        %p252 = pneg %p102
        %p253 = pneg %p99
        %p254 = pneg %p123
        %p255 = pneg %p120
        %p256 = pneg %p144
        %p257 = pneg %p141
        %p258 = pneg %p165
        %p259 = pneg %p162
        %p260 = pneg %p191
        %p261 = pneg %p188
        %s262 = sand.u32 %s178, 1
        %s263 = sand.u32 %s178, 1
        %s264 = smul.addr %s263, 32
        %s265 = scalar_lea.vmem [#allocation2], %s264
        %p266 = scmp.lt.s32.totalorder %s18, 3
        %s267 = scalar_select %p266, %s18, 3
        %s268 = smul.addr %s267, 8
        %s269 = scalar_lea.vmem %s0, %s268
        %v270 = vld [vmem:[%s269] sm:$0xff]
        %v271 = vld [vmem:[%s1] sm:$0xff]
        %v272 = vld [vmem:[%s1 + $0x8] sm:$0xff]
        %v273 = vld [vmem:[%s1 + $0x10] sm:$0xff]
        %v274 = vld [vmem:[%s1 + $0x18] sm:$0xff]
        %v275 = vld [vmem:[%s2] sm:$0xf]
        %v278 = vunpack.c.l.s4 1966171168
        %v279 = vunpack.c.0.s8 %v278
        %v280 = vlaneseq
        %v281 = vshrl.u32 %v280, 7
        %v282 = vsub.s32 %v279, %v281
        %v283 = vrot.slane %v275, %v282
        %v284 = vcombine.high %v283, %v283
        %v286 = vunpack.c.l.s4 1966171168
        %v287 = vunpack.c.0.s8 %v286
        %v288 = vlaneseq
        %v289 = vshrl.u32 %v288, 7
        %v290 = vsub.s32 %v287, %v289
        %v291 = vrot.slane %v283, %v290
        %v293 = vunpack.c.l.s4 1966171168
        %v294 = vunpack.c.0.s8 %v293
        %v295 = vlaneseq
        %v296 = vshrl.u32 %v295, 7
        %v297 = vsub.s32 %v294, %v296
        %v298 = vrot.slane %v284, %v297
        %v299 = vcombine.high %v291, %v291
        %v300 = vcombine.high %v298, %v298
        %v301 = vlaneseq
        %v302 = vshrl.u32 %v301, 7
        %v303 = vsub.s32 0, %v302
        %v304 = vrot.slane %v291, %v303
        %v305 = vlaneseq
        %v306 = vshrl.u32 %v305, 7
        %v307 = vsub.s32 0, %v306
        %v308 = vrot.slane %v298, %v307
        %v309 = vlaneseq
        %v310 = vshrl.u32 %v309, 7
        %v311 = vsub.s32 0, %v310
        %v312 = vrot.slane %v299, %v311
        %v313 = vlaneseq
        %v314 = vshrl.u32 %v313, 7
        %v315 = vsub.s32 0, %v314
        %v316 = vrot.slane %v300, %v315
        %vm321 = vcmask 64512
        %v323 = vsel %vm321, %v270, 0
        %325 = vmatprep.subr.mxu0 0.0
        %326 = vmatpush1.msra.mxu0 %v271
        %327 = vmatprep.subr.mxu0 0.0
        %328 = vmatpush1.msra.mxu0 0.0
        %329 = vmatprep.subr.mxu0 0.0
        %330 = vmatpush1.msra.mxu0 0.0
        %331 = vmatprep.subr.mxu0 0.0
        %332 = vmatpush1.msra.mxu0 0.0
        %333 = vmatprep.subr.mxu0 0.0
        %334 = vmatpush1.msra.mxu0 0.0
        %335 = vmatprep.subr.mxu0 0.0
        %336 = vmatpush1.msra.mxu0 0.0
        %337 = vmatprep.subr.mxu0 0.0
        %338 = vmatpush1.msra.mxu0 0.0
        %339 = vmatprep.subr.mxu0 0.0
        %340 = vmatpush1.msra.mxu0 0.0
        %341 = vmatprep.subr.mxu0 0.0
        %342 = vmatpush1.msra.mxu0 0.0
        %343 = vmatprep.subr.mxu0 0.0
        %344 = vmatpush1.msra.mxu0 0.0
        %345 = vmatprep.subr.mxu0 0.0
        %346 = vmatpush1.msra.mxu0 0.0
        %347 = vmatprep.subr.mxu0 0.0
        %348 = vmatpush1.msra.mxu0 0.0
        %349 = vmatprep.subr.mxu0 0.0
        %350 = vmatpush1.msra.mxu0 0.0
        %351 = vmatprep.subr.mxu0 0.0
        %352 = vmatpush1.msra.mxu0 0.0
        %353 = vmatprep.subr.mxu0 0.0
        %354 = vmatpush1.msra.mxu0 0.0
        %355 = vmatprep.subr.mxu0 0.0
        %356 = vmatpush1.msra.mxu0 0.0
        %357 = vmatprep.subr.mxu0 0.0
        %358 = vmatpush1.msra.mxu0 0.0
        %359 = vmatprep.subr.mxu0 0.0
        %360 = vmatpush1.msra.mxu0 0.0
        %361 = vmatprep.subr.mxu0 0.0
        %362 = vmatpush1.msra.mxu0 0.0
        %363 = vmatprep.subr.mxu0 0.0
        %364 = vmatpush1.msra.mxu0 0.0
        %365 = vmatprep.subr.mxu0 0.0
        %366 = vmatpush1.msra.mxu0 0.0
        %367 = vmatprep.subr.mxu0 0.0
        %368 = vmatpush1.msra.mxu0 0.0
        %369 = vmatprep.subr.mxu0 0.0
        %370 = vmatpush1.msra.mxu0 0.0
        %371 = vmatprep.subr.mxu0 0.0
        %372 = vmatpush1.msra.mxu0 0.0
        %373 = vmatprep.subr.mxu0 0.0
        %374 = vmatpush1.msra.mxu0 0.0
        %375 = vmatprep.subr.mxu0 0.0
        %376 = vmatpush1.msra.mxu0 0.0
        %377 = vmatprep.subr.mxu0 0.0
        %378 = vmatpush1.msra.mxu0 0.0
        %379 = vmatprep.subr.mxu0 0.0
        %380 = vmatpush1.msra.mxu0 0.0
        %381 = vmatprep.subr.mxu0 0.0
        %382 = vmatpush1.msra.mxu0 0.0
        %383 = vmatprep.subr.mxu0 0.0
        %384 = vmatpush1.msra.mxu0 0.0
        %385 = vmatprep.subr.mxu0 0.0
        %386 = vmatpush1.msra.mxu0 0.0
        %387 = vmatprep.subr.mxu0 0.0
        %388 = vmatpush1.msra.mxu0 0.0
        %389 = vmatprep.mubr.f32.mxu0 0.0
        %390 = vmatmul.mubr.f32.gmra.mrb[0].mxu0 %v323
        %v391 = vpop.f32.mrb[0].mxu0
        %v392 = vadd.f32 %v304, %v391
        %v393 = vpop.f32.mrb[0].mxu0
        %394 = vdwg.mxu0
        %395 = vmatprep.subr.mxu0 0.0
        %396 = vmatpush1.msra.mxu0 %v272
        %397 = vmatprep.subr.mxu0 0.0
        %398 = vmatpush1.msra.mxu0 0.0
        %399 = vmatprep.subr.mxu0 0.0
        %400 = vmatpush1.msra.mxu0 0.0
        %401 = vmatprep.subr.mxu0 0.0
        %402 = vmatpush1.msra.mxu0 0.0
        %403 = vmatprep.subr.mxu0 0.0
        %404 = vmatpush1.msra.mxu0 0.0
        %405 = vmatprep.subr.mxu0 0.0
        %406 = vmatpush1.msra.mxu0 0.0
        %407 = vmatprep.subr.mxu0 0.0
        %408 = vmatpush1.msra.mxu0 0.0
        %409 = vmatprep.subr.mxu0 0.0
        %410 = vmatpush1.msra.mxu0 0.0
        %411 = vmatprep.subr.mxu0 0.0
        %412 = vmatpush1.msra.mxu0 0.0
        %413 = vmatprep.subr.mxu0 0.0
        %414 = vmatpush1.msra.mxu0 0.0
        %415 = vmatprep.subr.mxu0 0.0
        %416 = vmatpush1.msra.mxu0 0.0
        %417 = vmatprep.subr.mxu0 0.0
        %418 = vmatpush1.msra.mxu0 0.0
        %419 = vmatprep.subr.mxu0 0.0
        %420 = vmatpush1.msra.mxu0 0.0
        %421 = vmatprep.subr.mxu0 0.0
        %422 = vmatpush1.msra.mxu0 0.0
        %423 = vmatprep.subr.mxu0 0.0
        %424 = vmatpush1.msra.mxu0 0.0
        %425 = vmatprep.subr.mxu0 0.0
        %426 = vmatpush1.msra.mxu0 0.0
        %427 = vmatprep.subr.mxu0 0.0
        %428 = vmatpush1.msra.mxu0 0.0
        %429 = vmatprep.subr.mxu0 0.0
        %430 = vmatpush1.msra.mxu0 0.0
        %431 = vmatprep.subr.mxu0 0.0
        %432 = vmatpush1.msra.mxu0 0.0
        %433 = vmatprep.subr.mxu0 0.0
        %434 = vmatpush1.msra.mxu0 0.0
        %435 = vmatprep.subr.mxu0 0.0
        %436 = vmatpush1.msra.mxu0 0.0
        %437 = vmatprep.subr.mxu0 0.0
        %438 = vmatpush1.msra.mxu0 0.0
        %439 = vmatprep.subr.mxu0 0.0
        %440 = vmatpush1.msra.mxu0 0.0
        %441 = vmatprep.subr.mxu0 0.0
        %442 = vmatpush1.msra.mxu0 0.0
        %443 = vmatprep.subr.mxu0 0.0
        %444 = vmatpush1.msra.mxu0 0.0
        %445 = vmatprep.subr.mxu0 0.0
        %446 = vmatpush1.msra.mxu0 0.0
        %447 = vmatprep.subr.mxu0 0.0
        %448 = vmatpush1.msra.mxu0 0.0
        %449 = vmatprep.subr.mxu0 0.0
        %450 = vmatpush1.msra.mxu0 0.0
        %451 = vmatprep.subr.mxu0 0.0
        %452 = vmatpush1.msra.mxu0 0.0
        %453 = vmatprep.subr.mxu0 0.0
        %454 = vmatpush1.msra.mxu0 0.0
        %455 = vmatprep.subr.mxu0 0.0
        %456 = vmatpush1.msra.mxu0 0.0
        %457 = vmatprep.subr.mxu0 0.0
        %458 = vmatpush1.msra.mxu0 0.0
        %459 = vmatprep.mubr.f32.mxu0 0.0
        %460 = vmatmul.mubr.f32.gmra.mrb[0].mxu0 %v323
        %v461 = vpop.f32.mrb[0].mxu0
        %v462 = vadd.f32 %v308, %v461
        %v463 = vpop.f32.mrb[0].mxu0
        %464 = vdwg.mxu0
        %465 = vmatprep.subr.mxu0 0.0
        %466 = vmatpush1.msra.mxu0 %v273
        %467 = vmatprep.subr.mxu0 0.0
        %468 = vmatpush1.msra.mxu0 0.0
        %469 = vmatprep.subr.mxu0 0.0
        %470 = vmatpush1.msra.mxu0 0.0
        %471 = vmatprep.subr.mxu0 0.0
        %472 = vmatpush1.msra.mxu0 0.0
        %473 = vmatprep.subr.mxu0 0.0
        %474 = vmatpush1.msra.mxu0 0.0
        %475 = vmatprep.subr.mxu0 0.0
        %476 = vmatpush1.msra.mxu0 0.0
        %477 = vmatprep.subr.mxu0 0.0
        %478 = vmatpush1.msra.mxu0 0.0
        %479 = vmatprep.subr.mxu0 0.0
        %480 = vmatpush1.msra.mxu0 0.0
        %481 = vmatprep.subr.mxu0 0.0
        %482 = vmatpush1.msra.mxu0 0.0
        %483 = vmatprep.subr.mxu0 0.0
        %484 = vmatpush1.msra.mxu0 0.0
        %485 = vmatprep.subr.mxu0 0.0
        %486 = vmatpush1.msra.mxu0 0.0
        %487 = vmatprep.subr.mxu0 0.0
        %488 = vmatpush1.msra.mxu0 0.0
        %489 = vmatprep.subr.mxu0 0.0
        %490 = vmatpush1.msra.mxu0 0.0
        %491 = vmatprep.subr.mxu0 0.0
        %492 = vmatpush1.msra.mxu0 0.0
        %493 = vmatprep.subr.mxu0 0.0
        %494 = vmatpush1.msra.mxu0 0.0
        %495 = vmatprep.subr.mxu0 0.0
        %496 = vmatpush1.msra.mxu0 0.0
        %497 = vmatprep.subr.mxu0 0.0
        %498 = vmatpush1.msra.mxu0 0.0
        %499 = vmatprep.subr.mxu0 0.0
        %500 = vmatpush1.msra.mxu0 0.0
        %501 = vmatprep.subr.mxu0 0.0
        %502 = vmatpush1.msra.mxu0 0.0
        %503 = vmatprep.subr.mxu0 0.0
        %504 = vmatpush1.msra.mxu0 0.0
        %505 = vmatprep.subr.mxu0 0.0
        %506 = vmatpush1.msra.mxu0 0.0
        %507 = vmatprep.subr.mxu0 0.0
        %508 = vmatpush1.msra.mxu0 0.0
        %509 = vmatprep.subr.mxu0 0.0
        %510 = vmatpush1.msra.mxu0 0.0
        %511 = vmatprep.subr.mxu0 0.0
        %512 = vmatpush1.msra.mxu0 0.0
        %513 = vmatprep.subr.mxu0 0.0
        %514 = vmatpush1.msra.mxu0 0.0
        %515 = vmatprep.subr.mxu0 0.0
        %516 = vmatpush1.msra.mxu0 0.0
        %517 = vmatprep.subr.mxu0 0.0
        %518 = vmatpush1.msra.mxu0 0.0
        %519 = vmatprep.subr.mxu0 0.0
        %520 = vmatpush1.msra.mxu0 0.0
        %521 = vmatprep.subr.mxu0 0.0
        %522 = vmatpush1.msra.mxu0 0.0
        %523 = vmatprep.subr.mxu0 0.0
        %524 = vmatpush1.msra.mxu0 0.0
        %525 = vmatprep.subr.mxu0 0.0
        %526 = vmatpush1.msra.mxu0 0.0
        %527 = vmatprep.subr.mxu0 0.0
        %528 = vmatpush1.msra.mxu0 0.0
        %529 = vmatprep.mubr.f32.mxu0 0.0
        %530 = vmatmul.mubr.f32.gmra.mrb[0].mxu0 %v323
        %v531 = vpop.f32.mrb[0].mxu0
        %v532 = vadd.f32 %v312, %v531
        %v533 = vpop.f32.mrb[0].mxu0
        %534 = vdwg.mxu0
        %535 = vmatprep.subr.mxu0 0.0
        %536 = vmatpush1.msra.mxu0 %v274
        %537 = vmatprep.subr.mxu0 0.0
        %538 = vmatpush1.msra.mxu0 0.0
        %539 = vmatprep.subr.mxu0 0.0
        %540 = vmatpush1.msra.mxu0 0.0
        %541 = vmatprep.subr.mxu0 0.0
        %542 = vmatpush1.msra.mxu0 0.0
        %543 = vmatprep.subr.mxu0 0.0
        %544 = vmatpush1.msra.mxu0 0.0
        %545 = vmatprep.subr.mxu0 0.0
        %546 = vmatpush1.msra.mxu0 0.0
        %547 = vmatprep.subr.mxu0 0.0
        %548 = vmatpush1.msra.mxu0 0.0
        %549 = vmatprep.subr.mxu0 0.0
        %550 = vmatpush1.msra.mxu0 0.0
        %551 = vmatprep.subr.mxu0 0.0
        %552 = vmatpush1.msra.mxu0 0.0
        %553 = vmatprep.subr.mxu0 0.0
        %554 = vmatpush1.msra.mxu0 0.0
        %555 = vmatprep.subr.mxu0 0.0
        %556 = vmatpush1.msra.mxu0 0.0
        %557 = vmatprep.subr.mxu0 0.0
        %558 = vmatpush1.msra.mxu0 0.0
        %559 = vmatprep.subr.mxu0 0.0
        %560 = vmatpush1.msra.mxu0 0.0
        %561 = vmatprep.subr.mxu0 0.0
        %562 = vmatpush1.msra.mxu0 0.0
        %563 = vmatprep.subr.mxu0 0.0
        %564 = vmatpush1.msra.mxu0 0.0
        %565 = vmatprep.subr.mxu0 0.0
        %566 = vmatpush1.msra.mxu0 0.0
        %567 = vmatprep.subr.mxu0 0.0
        %568 = vmatpush1.msra.mxu0 0.0
        %569 = vmatprep.subr.mxu0 0.0
        %570 = vmatpush1.msra.mxu0 0.0
        %571 = vmatprep.subr.mxu0 0.0
        %572 = vmatpush1.msra.mxu0 0.0
        %573 = vmatprep.subr.mxu0 0.0
        %574 = vmatpush1.msra.mxu0 0.0
        %575 = vmatprep.subr.mxu0 0.0
        %576 = vmatpush1.msra.mxu0 0.0
        %577 = vmatprep.subr.mxu0 0.0
        %578 = vmatpush1.msra.mxu0 0.0
        %579 = vmatprep.subr.mxu0 0.0
        %580 = vmatpush1.msra.mxu0 0.0
        %581 = vmatprep.subr.mxu0 0.0
        %582 = vmatpush1.msra.mxu0 0.0
        %583 = vmatprep.subr.mxu0 0.0
        %584 = vmatpush1.msra.mxu0 0.0
        %585 = vmatprep.subr.mxu0 0.0
        %586 = vmatpush1.msra.mxu0 0.0
        %587 = vmatprep.subr.mxu0 0.0
        %588 = vmatpush1.msra.mxu0 0.0
        %589 = vmatprep.subr.mxu0 0.0
        %590 = vmatpush1.msra.mxu0 0.0
        %591 = vmatprep.subr.mxu0 0.0
        %592 = vmatpush1.msra.mxu0 0.0
        %593 = vmatprep.subr.mxu0 0.0
        %594 = vmatpush1.msra.mxu0 0.0
        %595 = vmatprep.subr.mxu0 0.0
        %596 = vmatpush1.msra.mxu0 0.0
        %597 = vmatprep.subr.mxu0 0.0
        %598 = vmatpush1.msra.mxu0 0.0
        %599 = vmatprep.mubr.f32.mxu0 0.0
        %600 = vmatmul.mubr.f32.gmra.mrb[0].mxu0 %v323
        %v601 = vpop.f32.mrb[0].mxu0
        %v602 = vadd.f32 %v316, %v601
        %v603 = vpop.f32.mrb[0].mxu0
        %604 = vdwg.mxu0
        %v605 = vmax.f32 %v392, 0.0
        %v606 = vmax.f32 %v462, 0.0
        %v607 = vmax.f32 %v532, 0.0
        %v608 = vmax.f32 %v602, 0.0
        %v609 = vld [vmem:[%s3] sm:$0xff]
        %v610 = vld [vmem:[%s3 + $0x8] sm:$0xff]
        %v611 = vld [vmem:[%s3 + $0x10] sm:$0xff]
        %v612 = vld [vmem:[%s3 + $0x18] sm:$0xff]
        %v613 = vld [vmem:[%s3 + $0x20] sm:$0xff]
        %v614 = vld [vmem:[%s3 + $0x28] sm:$0xff]
        %v615 = vld [vmem:[%s3 + $0x30] sm:$0xff]
        %v616 = vld [vmem:[%s3 + $0x38] sm:$0xff]
        %v617 = vld [vmem:[%s4] sm:$0xf]
        %v620 = vunpack.c.l.s4 1966171168
        %v621 = vunpack.c.0.s8 %v620
        %v622 = vlaneseq
        %v623 = vshrl.u32 %v622, 7
        %v624 = vsub.s32 %v621, %v623
        %v625 = vrot.slane %v617, %v624
        %v626 = vcombine.high %v625, %v625
        %v628 = vunpack.c.l.s4 1966171168
        %v629 = vunpack.c.0.s8 %v628
        %v630 = vlaneseq
        %v631 = vshrl.u32 %v630, 7
        %v632 = vsub.s32 %v629, %v631
        %v633 = vrot.slane %v625, %v632
        %v635 = vunpack.c.l.s4 1966171168
        %v636 = vunpack.c.0.s8 %v635
        %v637 = vlaneseq
        %v638 = vshrl.u32 %v637, 7
        %v639 = vsub.s32 %v636, %v638
        %v640 = vrot.slane %v626, %v639
        %v641 = vcombine.high %v633, %v633
        %v642 = vcombine.high %v640, %v640
        %v643 = vlaneseq
        %v644 = vshrl.u32 %v643, 7
        %v645 = vsub.s32 0, %v644
        %v646 = vrot.slane %v633, %v645
        %v647 = vlaneseq
        %v648 = vshrl.u32 %v647, 7
        %v649 = vsub.s32 0, %v648
        %v650 = vrot.slane %v640, %v649
        %v651 = vlaneseq
        %v652 = vshrl.u32 %v651, 7
        %v653 = vsub.s32 0, %v652
        %v654 = vrot.slane %v641, %v653
        %v655 = vlaneseq
        %v656 = vshrl.u32 %v655, 7
        %v657 = vsub.s32 0, %v656
        %v658 = vrot.slane %v642, %v657
        %vm663 = vcmask 130048
        %v665 = vsel %vm663, %v605, 0
        %667 = vmatprep.subr.mxu0 0.0
        %668 = vmatpush1.msra.mxu0 %v609
        %669 = vmatprep.subr.mxu0 0.0
        %670 = vmatpush1.msra.mxu0 %v610
        %671 = vmatprep.subr.mxu0 0.0
        %672 = vmatpush1.msra.mxu0 0.0
        %673 = vmatprep.subr.mxu0 0.0
        %674 = vmatpush1.msra.mxu0 0.0
        %675 = vmatprep.subr.mxu0 0.0
        %676 = vmatpush1.msra.mxu0 0.0
        %677 = vmatprep.subr.mxu0 0.0
        %678 = vmatpush1.msra.mxu0 0.0
        %679 = vmatprep.subr.mxu0 0.0
        %680 = vmatpush1.msra.mxu0 0.0
        %681 = vmatprep.subr.mxu0 0.0
        %682 = vmatpush1.msra.mxu0 0.0
        %683 = vmatprep.subr.mxu0 0.0
        %684 = vmatpush1.msra.mxu0 0.0
        %685 = vmatprep.subr.mxu0 0.0
        %686 = vmatpush1.msra.mxu0 0.0
        %687 = vmatprep.subr.mxu0 0.0
        %688 = vmatpush1.msra.mxu0 0.0
        %689 = vmatprep.subr.mxu0 0.0
        %690 = vmatpush1.msra.mxu0 0.0
        %691 = vmatprep.subr.mxu0 0.0
        %692 = vmatpush1.msra.mxu0 0.0
        %693 = vmatprep.subr.mxu0 0.0
        %694 = vmatpush1.msra.mxu0 0.0
        %695 = vmatprep.subr.mxu0 0.0
        %696 = vmatpush1.msra.mxu0 0.0
        %697 = vmatprep.subr.mxu0 0.0
        %698 = vmatpush1.msra.mxu0 0.0
        %699 = vmatprep.subr.mxu0 0.0
        %700 = vmatpush1.msra.mxu0 0.0
        %701 = vmatprep.subr.mxu0 0.0
        %702 = vmatpush1.msra.mxu0 0.0
        %703 = vmatprep.subr.mxu0 0.0
        %704 = vmatpush1.msra.mxu0 0.0
        %705 = vmatprep.subr.mxu0 0.0
        %706 = vmatpush1.msra.mxu0 0.0
        %707 = vmatprep.subr.mxu0 0.0
        %708 = vmatpush1.msra.mxu0 0.0
        %709 = vmatprep.subr.mxu0 0.0
        %710 = vmatpush1.msra.mxu0 0.0
        %711 = vmatprep.subr.mxu0 0.0
        %712 = vmatpush1.msra.mxu0 0.0
        %713 = vmatprep.subr.mxu0 0.0
        %714 = vmatpush1.msra.mxu0 0.0
        %715 = vmatprep.subr.mxu0 0.0
        %716 = vmatpush1.msra.mxu0 0.0
        %717 = vmatprep.subr.mxu0 0.0
        %718 = vmatpush1.msra.mxu0 0.0
        %719 = vmatprep.subr.mxu0 0.0
        %720 = vmatpush1.msra.mxu0 0.0
        %721 = vmatprep.subr.mxu0 0.0
        %722 = vmatpush1.msra.mxu0 0.0
        %723 = vmatprep.subr.mxu0 0.0
        %724 = vmatpush1.msra.mxu0 0.0
        %725 = vmatprep.subr.mxu0 0.0
        %726 = vmatpush1.msra.mxu0 0.0
        %727 = vmatprep.subr.mxu0 0.0
        %728 = vmatpush1.msra.mxu0 0.0
        %729 = vmatprep.subr.mxu0 0.0
        %730 = vmatpush1.msra.mxu0 0.0
        %731 = vmatprep.mubr.f32.mxu0 0.0
        %732 = vmatmul.mubr.f32.gmra.mrb[0].mxu0 %v665
        %v733 = vpop.f32.mrb[0].mxu0
        %v734 = vadd.f32 %v646, %v733
        %v735 = vpop.f32.mrb[0].mxu0
        %736 = vdwg.mxu0
        %v738 = vsel %vm663, %v606, 0
        %740 = vmatprep.subr.mxu0 0.0
        %741 = vmatpush1.msra.mxu0 %v611
        %742 = vmatprep.subr.mxu0 0.0
        %743 = vmatpush1.msra.mxu0 %v612
        %744 = vmatprep.subr.mxu0 0.0
        %745 = vmatpush1.msra.mxu0 0.0
        %746 = vmatprep.subr.mxu0 0.0
        %747 = vmatpush1.msra.mxu0 0.0
        %748 = vmatprep.subr.mxu0 0.0
        %749 = vmatpush1.msra.mxu0 0.0
        %750 = vmatprep.subr.mxu0 0.0
        %751 = vmatpush1.msra.mxu0 0.0
        %752 = vmatprep.subr.mxu0 0.0
        %753 = vmatpush1.msra.mxu0 0.0
        %754 = vmatprep.subr.mxu0 0.0
        %755 = vmatpush1.msra.mxu0 0.0
        %756 = vmatprep.subr.mxu0 0.0
        %757 = vmatpush1.msra.mxu0 0.0
        %758 = vmatprep.subr.mxu0 0.0
        %759 = vmatpush1.msra.mxu0 0.0
        %760 = vmatprep.subr.mxu0 0.0
        %761 = vmatpush1.msra.mxu0 0.0
        %762 = vmatprep.subr.mxu0 0.0
        %763 = vmatpush1.msra.mxu0 0.0
        %764 = vmatprep.subr.mxu0 0.0
        %765 = vmatpush1.msra.mxu0 0.0
        %766 = vmatprep.subr.mxu0 0.0
        %767 = vmatpush1.msra.mxu0 0.0
        %768 = vmatprep.subr.mxu0 0.0
        %769 = vmatpush1.msra.mxu0 0.0
        %770 = vmatprep.subr.mxu0 0.0
        %771 = vmatpush1.msra.mxu0 0.0
        %772 = vmatprep.subr.mxu0 0.0
        %773 = vmatpush1.msra.mxu0 0.0
        %774 = vmatprep.subr.mxu0 0.0
        %775 = vmatpush1.msra.mxu0 0.0
        %776 = vmatprep.subr.mxu0 0.0
        %777 = vmatpush1.msra.mxu0 0.0
        %778 = vmatprep.subr.mxu0 0.0
        %779 = vmatpush1.msra.mxu0 0.0
        %780 = vmatprep.subr.mxu0 0.0
        %781 = vmatpush1.msra.mxu0 0.0
        %782 = vmatprep.subr.mxu0 0.0
        %783 = vmatpush1.msra.mxu0 0.0
        %784 = vmatprep.subr.mxu0 0.0
        %785 = vmatpush1.msra.mxu0 0.0
        %786 = vmatprep.subr.mxu0 0.0
        %787 = vmatpush1.msra.mxu0 0.0
        %788 = vmatprep.subr.mxu0 0.0
        %789 = vmatpush1.msra.mxu0 0.0
        %790 = vmatprep.subr.mxu0 0.0
        %791 = vmatpush1.msra.mxu0 0.0
        %792 = vmatprep.subr.mxu0 0.0
        %793 = vmatpush1.msra.mxu0 0.0
        %794 = vmatprep.subr.mxu0 0.0
        %795 = vmatpush1.msra.mxu0 0.0
        %796 = vmatprep.subr.mxu0 0.0
        %797 = vmatpush1.msra.mxu0 0.0
        %798 = vmatprep.subr.mxu0 0.0
        %799 = vmatpush1.msra.mxu0 0.0
        %800 = vmatprep.subr.mxu0 0.0
        %801 = vmatpush1.msra.mxu0 0.0
        %802 = vmatprep.subr.mxu0 0.0
        %803 = vmatpush1.msra.mxu0 0.0
        %804 = vmatprep.mubr.f32.mxu0 0.0
        %805 = vmatmul.mubr.f32.gmra.mrb[0].mxu0 %v738
        %v806 = vpop.f32.mrb[0].mxu0
        %v807 = vadd.f32 %v650, %v806
        %v808 = vpop.f32.mrb[0].mxu0
        %809 = vdwg.mxu0
        %v811 = vsel %vm663, %v607, 0
        %813 = vmatprep.subr.mxu0 0.0
        %814 = vmatpush1.msra.mxu0 %v613
        %815 = vmatprep.subr.mxu0 0.0
        %816 = vmatpush1.msra.mxu0 %v614
        %817 = vmatprep.subr.mxu0 0.0
        %818 = vmatpush1.msra.mxu0 0.0
        %819 = vmatprep.subr.mxu0 0.0
        %820 = vmatpush1.msra.mxu0 0.0
        %821 = vmatprep.subr.mxu0 0.0
        %822 = vmatpush1.msra.mxu0 0.0
        %823 = vmatprep.subr.mxu0 0.0
        %824 = vmatpush1.msra.mxu0 0.0
        %825 = vmatprep.subr.mxu0 0.0
        %826 = vmatpush1.msra.mxu0 0.0
        %827 = vmatprep.subr.mxu0 0.0
        %828 = vmatpush1.msra.mxu0 0.0
        %829 = vmatprep.subr.mxu0 0.0
        %830 = vmatpush1.msra.mxu0 0.0
        %831 = vmatprep.subr.mxu0 0.0
        %832 = vmatpush1.msra.mxu0 0.0
        %833 = vmatprep.subr.mxu0 0.0
        %834 = vmatpush1.msra.mxu0 0.0
        %835 = vmatprep.subr.mxu0 0.0
        %836 = vmatpush1.msra.mxu0 0.0
        %837 = vmatprep.subr.mxu0 0.0
        %838 = vmatpush1.msra.mxu0 0.0
        %839 = vmatprep.subr.mxu0 0.0
        %840 = vmatpush1.msra.mxu0 0.0
        %841 = vmatprep.subr.mxu0 0.0
        %842 = vmatpush1.msra.mxu0 0.0
        %843 = vmatprep.subr.mxu0 0.0
        %844 = vmatpush1.msra.mxu0 0.0
        %845 = vmatprep.subr.mxu0 0.0
        %846 = vmatpush1.msra.mxu0 0.0
        %847 = vmatprep.subr.mxu0 0.0
        %848 = vmatpush1.msra.mxu0 0.0
        %849 = vmatprep.subr.mxu0 0.0
        %850 = vmatpush1.msra.mxu0 0.0
        %851 = vmatprep.subr.mxu0 0.0
        %852 = vmatpush1.msra.mxu0 0.0
        %853 = vmatprep.subr.mxu0 0.0
        %854 = vmatpush1.msra.mxu0 0.0
        %855 = vmatprep.subr.mxu0 0.0
        %856 = vmatpush1.msra.mxu0 0.0
        %857 = vmatprep.subr.mxu0 0.0
        %858 = vmatpush1.msra.mxu0 0.0
        %859 = vmatprep.subr.mxu0 0.0
        %860 = vmatpush1.msra.mxu0 0.0
        %861 = vmatprep.subr.mxu0 0.0
        %862 = vmatpush1.msra.mxu0 0.0
        %863 = vmatprep.subr.mxu0 0.0
        %864 = vmatpush1.msra.mxu0 0.0
        %865 = vmatprep.subr.mxu0 0.0
        %866 = vmatpush1.msra.mxu0 0.0
        %867 = vmatprep.subr.mxu0 0.0
        %868 = vmatpush1.msra.mxu0 0.0
        %869 = vmatprep.subr.mxu0 0.0
        %870 = vmatpush1.msra.mxu0 0.0
        %871 = vmatprep.subr.mxu0 0.0
        %872 = vmatpush1.msra.mxu0 0.0
        %873 = vmatprep.subr.mxu0 0.0
        %874 = vmatpush1.msra.mxu0 0.0
        %875 = vmatprep.subr.mxu0 0.0
        %876 = vmatpush1.msra.mxu0 0.0
        %877 = vmatprep.mubr.f32.mxu0 0.0
        %878 = vmatmul.mubr.f32.gmra.mrb[0].mxu0 %v811
        %v879 = vpop.f32.mrb[0].mxu0
        %v880 = vadd.f32 %v654, %v879
        %v881 = vpop.f32.mrb[0].mxu0
        %882 = vdwg.mxu0
        %v884 = vsel %vm663, %v608, 0
        %886 = vmatprep.subr.mxu0 0.0
        %887 = vmatpush1.msra.mxu0 %v615
        %888 = vmatprep.subr.mxu0 0.0
        %889 = vmatpush1.msra.mxu0 %v616
        %890 = vmatprep.subr.mxu0 0.0
        %891 = vmatpush1.msra.mxu0 0.0
        %892 = vmatprep.subr.mxu0 0.0
        %893 = vmatpush1.msra.mxu0 0.0
        %894 = vmatprep.subr.mxu0 0.0
        %895 = vmatpush1.msra.mxu0 0.0
        %896 = vmatprep.subr.mxu0 0.0
        %897 = vmatpush1.msra.mxu0 0.0
        %898 = vmatprep.subr.mxu0 0.0
        %899 = vmatpush1.msra.mxu0 0.0
        %900 = vmatprep.subr.mxu0 0.0
        %901 = vmatpush1.msra.mxu0 0.0
        %902 = vmatprep.subr.mxu0 0.0
        %903 = vmatpush1.msra.mxu0 0.0
        %904 = vmatprep.subr.mxu0 0.0
        %905 = vmatpush1.msra.mxu0 0.0
        %906 = vmatprep.subr.mxu0 0.0
        %907 = vmatpush1.msra.mxu0 0.0
        %908 = vmatprep.subr.mxu0 0.0
        %909 = vmatpush1.msra.mxu0 0.0
        %910 = vmatprep.subr.mxu0 0.0
        %911 = vmatpush1.msra.mxu0 0.0
        %912 = vmatprep.subr.mxu0 0.0
        %913 = vmatpush1.msra.mxu0 0.0
        %914 = vmatprep.subr.mxu0 0.0
        %915 = vmatpush1.msra.mxu0 0.0
        %916 = vmatprep.subr.mxu0 0.0
        %917 = vmatpush1.msra.mxu0 0.0
        %918 = vmatprep.subr.mxu0 0.0
        %919 = vmatpush1.msra.mxu0 0.0
        %920 = vmatprep.subr.mxu0 0.0
        %921 = vmatpush1.msra.mxu0 0.0
        %922 = vmatprep.subr.mxu0 0.0
        %923 = vmatpush1.msra.mxu0 0.0
        %924 = vmatprep.subr.mxu0 0.0
        %925 = vmatpush1.msra.mxu0 0.0
        %926 = vmatprep.subr.mxu0 0.0
        %927 = vmatpush1.msra.mxu0 0.0
        %928 = vmatprep.subr.mxu0 0.0
        %929 = vmatpush1.msra.mxu0 0.0
        %930 = vmatprep.subr.mxu0 0.0
        %931 = vmatpush1.msra.mxu0 0.0
        %932 = vmatprep.subr.mxu0 0.0
        %933 = vmatpush1.msra.mxu0 0.0
        %934 = vmatprep.subr.mxu0 0.0
        %935 = vmatpush1.msra.mxu0 0.0
        %936 = vmatprep.subr.mxu0 0.0
        %937 = vmatpush1.msra.mxu0 0.0
        %938 = vmatprep.subr.mxu0 0.0
        %939 = vmatpush1.msra.mxu0 0.0
        %940 = vmatprep.subr.mxu0 0.0
        %941 = vmatpush1.msra.mxu0 0.0
        %942 = vmatprep.subr.mxu0 0.0
        %943 = vmatpush1.msra.mxu0 0.0
        %944 = vmatprep.subr.mxu0 0.0
        %945 = vmatpush1.msra.mxu0 0.0
        %946 = vmatprep.subr.mxu0 0.0
        %947 = vmatpush1.msra.mxu0 0.0
        %948 = vmatprep.subr.mxu0 0.0
        %949 = vmatpush1.msra.mxu0 0.0
        %950 = vmatprep.mubr.f32.mxu0 0.0
        %951 = vmatmul.mubr.f32.gmra.mrb[0].mxu0 %v884
        %v952 = vpop.f32.mrb[0].mxu0
        %v953 = vadd.f32 %v658, %v952
        %v954 = vpop.f32.mrb[0].mxu0
        %955 = vdwg.mxu0
        %v956 = vmax.f32 %v734, 0.0
        %v957 = vmax.f32 %v807, 0.0
        %v958 = vmax.f32 %v880, 0.0
        %v959 = vmax.f32 %v953, 0.0
        %v960 = vld [vmem:[%s5] sm:$0xff]
        %v961 = vld [vmem:[%s5 + $0x8] sm:$0xff]
        %v962 = vld [vmem:[%s5 + $0x10] sm:$0xff]
        %v963 = vld [vmem:[%s5 + $0x18] sm:$0xff]
        %v964 = vld [vmem:[%s5 + $0x20] sm:$0xff]
        %v965 = vld [vmem:[%s5 + $0x28] sm:$0xff]
        %v966 = vld [vmem:[%s5 + $0x30] sm:$0xff]
        %v967 = vld [vmem:[%s5 + $0x38] sm:$0xff]
        %v968 = vld [vmem:[%s6] sm:$0xf]
        %v971 = vunpack.c.l.s4 1966171168
        %v972 = vunpack.c.0.s8 %v971
        %v973 = vlaneseq
        %v974 = vshrl.u32 %v973, 7
        %v975 = vsub.s32 %v972, %v974
        %v976 = vrot.slane %v968, %v975
        %v977 = vcombine.high %v976, %v976
        %v979 = vunpack.c.l.s4 1966171168
        %v980 = vunpack.c.0.s8 %v979
        %v981 = vlaneseq
        %v982 = vshrl.u32 %v981, 7
        %v983 = vsub.s32 %v980, %v982
        %v984 = vrot.slane %v976, %v983
        %v986 = vunpack.c.l.s4 1966171168
        %v987 = vunpack.c.0.s8 %v986
        %v988 = vlaneseq
        %v989 = vshrl.u32 %v988, 7
        %v990 = vsub.s32 %v987, %v989
        %v991 = vrot.slane %v977, %v990
        %v992 = vcombine.high %v984, %v984
        %v993 = vcombine.high %v991, %v991
        %v994 = vlaneseq
        %v995 = vshrl.u32 %v994, 7
        %v996 = vsub.s32 0, %v995
        %v997 = vrot.slane %v984, %v996
        %v998 = vlaneseq
        %v999 = vshrl.u32 %v998, 7
        %v1000 = vsub.s32 0, %v999
        %v1001 = vrot.slane %v991, %v1000
        %v1002 = vlaneseq
        %v1003 = vshrl.u32 %v1002, 7
        %v1004 = vsub.s32 0, %v1003
        %v1005 = vrot.slane %v992, %v1004
        %v1006 = vlaneseq
        %v1007 = vshrl.u32 %v1006, 7
        %v1008 = vsub.s32 0, %v1007
        %v1009 = vrot.slane %v993, %v1008
        %v1015 = vsel %vm663, %v956, 0
        %1017 = vmatprep.subr.mxu0 0.0
        %1018 = vmatpush1.msra.mxu0 %v960
        %1019 = vmatprep.subr.mxu0 0.0
        %1020 = vmatpush1.msra.mxu0 %v961
        %1021 = vmatprep.subr.mxu0 0.0
        %1022 = vmatpush1.msra.mxu0 0.0
        %1023 = vmatprep.subr.mxu0 0.0
        %1024 = vmatpush1.msra.mxu0 0.0
        %1025 = vmatprep.subr.mxu0 0.0
        %1026 = vmatpush1.msra.mxu0 0.0
        %1027 = vmatprep.subr.mxu0 0.0
        %1028 = vmatpush1.msra.mxu0 0.0
        %1029 = vmatprep.subr.mxu0 0.0
        %1030 = vmatpush1.msra.mxu0 0.0
        %1031 = vmatprep.subr.mxu0 0.0
        %1032 = vmatpush1.msra.mxu0 0.0
        %1033 = vmatprep.subr.mxu0 0.0
        %1034 = vmatpush1.msra.mxu0 0.0
        %1035 = vmatprep.subr.mxu0 0.0
        %1036 = vmatpush1.msra.mxu0 0.0
        %1037 = vmatprep.subr.mxu0 0.0
        %1038 = vmatpush1.msra.mxu0 0.0
        %1039 = vmatprep.subr.mxu0 0.0
        %1040 = vmatpush1.msra.mxu0 0.0
        %1041 = vmatprep.subr.mxu0 0.0
        %1042 = vmatpush1.msra.mxu0 0.0
        %1043 = vmatprep.subr.mxu0 0.0
        %1044 = vmatpush1.msra.mxu0 0.0
        %1045 = vmatprep.subr.mxu0 0.0
        %1046 = vmatpush1.msra.mxu0 0.0
        %1047 = vmatprep.subr.mxu0 0.0
        %1048 = vmatpush1.msra.mxu0 0.0
        %1049 = vmatprep.subr.mxu0 0.0
        %1050 = vmatpush1.msra.mxu0 0.0
        %1051 = vmatprep.subr.mxu0 0.0
        %1052 = vmatpush1.msra.mxu0 0.0
        %1053 = vmatprep.subr.mxu0 0.0
        %1054 = vmatpush1.msra.mxu0 0.0
        %1055 = vmatprep.subr.mxu0 0.0
        %1056 = vmatpush1.msra.mxu0 0.0
        %1057 = vmatprep.subr.mxu0 0.0
        %1058 = vmatpush1.msra.mxu0 0.0
        %1059 = vmatprep.subr.mxu0 0.0
        %1060 = vmatpush1.msra.mxu0 0.0
        %1061 = vmatprep.subr.mxu0 0.0
        %1062 = vmatpush1.msra.mxu0 0.0
        %1063 = vmatprep.subr.mxu0 0.0
        %1064 = vmatpush1.msra.mxu0 0.0
        %1065 = vmatprep.subr.mxu0 0.0
        %1066 = vmatpush1.msra.mxu0 0.0
        %1067 = vmatprep.subr.mxu0 0.0
        %1068 = vmatpush1.msra.mxu0 0.0
        %1069 = vmatprep.subr.mxu0 0.0
        %1070 = vmatpush1.msra.mxu0 0.0
        %1071 = vmatprep.subr.mxu0 0.0
        %1072 = vmatpush1.msra.mxu0 0.0
        %1073 = vmatprep.subr.mxu0 0.0
        %1074 = vmatpush1.msra.mxu0 0.0
        %1075 = vmatprep.subr.mxu0 0.0
        %1076 = vmatpush1.msra.mxu0 0.0
        %1077 = vmatprep.subr.mxu0 0.0
        %1078 = vmatpush1.msra.mxu0 0.0
        %1079 = vmatprep.subr.mxu0 0.0
        %1080 = vmatpush1.msra.mxu0 0.0
        %1081 = vmatprep.mubr.f32.mxu0 0.0
        %1082 = vmatmul.mubr.f32.gmra.mrb[0].mxu0 %v1015
        %v1083 = vpop.f32.mrb[0].mxu0
        %v1084 = vadd.f32 %v997, %v1083
        %v1085 = vpop.f32.mrb[0].mxu0
        %1086 = vdwg.mxu0
        %v1088 = vsel %vm663, %v957, 0
        %1090 = vmatprep.subr.mxu0 0.0
        %1091 = vmatpush1.msra.mxu0 %v962
        %1092 = vmatprep.subr.mxu0 0.0
        %1093 = vmatpush1.msra.mxu0 %v963
        %1094 = vmatprep.subr.mxu0 0.0
        %1095 = vmatpush1.msra.mxu0 0.0
        %1096 = vmatprep.subr.mxu0 0.0
        %1097 = vmatpush1.msra.mxu0 0.0
        %1098 = vmatprep.subr.mxu0 0.0
        %1099 = vmatpush1.msra.mxu0 0.0
        %1100 = vmatprep.subr.mxu0 0.0
        %1101 = vmatpush1.msra.mxu0 0.0
        %1102 = vmatprep.subr.mxu0 0.0
        %1103 = vmatpush1.msra.mxu0 0.0
        %1104 = vmatprep.subr.mxu0 0.0
        %1105 = vmatpush1.msra.mxu0 0.0
        %1106 = vmatprep.subr.mxu0 0.0
        %1107 = vmatpush1.msra.mxu0 0.0
        %1108 = vmatprep.subr.mxu0 0.0
        %1109 = vmatpush1.msra.mxu0 0.0
        %1110 = vmatprep.subr.mxu0 0.0
        %1111 = vmatpush1.msra.mxu0 0.0
        %1112 = vmatprep.subr.mxu0 0.0
        %1113 = vmatpush1.msra.mxu0 0.0
        %1114 = vmatprep.subr.mxu0 0.0
        %1115 = vmatpush1.msra.mxu0 0.0
        %1116 = vmatprep.subr.mxu0 0.0
        %1117 = vmatpush1.msra.mxu0 0.0
        %1118 = vmatprep.subr.mxu0 0.0
        %1119 = vmatpush1.msra.mxu0 0.0
        %1120 = vmatprep.subr.mxu0 0.0
        %1121 = vmatpush1.msra.mxu0 0.0
        %1122 = vmatprep.subr.mxu0 0.0
        %1123 = vmatpush1.msra.mxu0 0.0
        %1124 = vmatprep.subr.mxu0 0.0
        %1125 = vmatpush1.msra.mxu0 0.0
        %1126 = vmatprep.subr.mxu0 0.0
        %1127 = vmatpush1.msra.mxu0 0.0
        %1128 = vmatprep.subr.mxu0 0.0
        %1129 = vmatpush1.msra.mxu0 0.0
        %1130 = vmatprep.subr.mxu0 0.0
        %1131 = vmatpush1.msra.mxu0 0.0
        %1132 = vmatprep.subr.mxu0 0.0
        %1133 = vmatpush1.msra.mxu0 0.0
        %1134 = vmatprep.subr.mxu0 0.0
        %1135 = vmatpush1.msra.mxu0 0.0
        %1136 = vmatprep.subr.mxu0 0.0
        %1137 = vmatpush1.msra.mxu0 0.0
        %1138 = vmatprep.subr.mxu0 0.0
        %1139 = vmatpush1.msra.mxu0 0.0
        %1140 = vmatprep.subr.mxu0 0.0
        %1141 = vmatpush1.msra.mxu0 0.0
        %1142 = vmatprep.subr.mxu0 0.0
        %1143 = vmatpush1.msra.mxu0 0.0
        %1144 = vmatprep.subr.mxu0 0.0
        %1145 = vmatpush1.msra.mxu0 0.0
        %1146 = vmatprep.subr.mxu0 0.0
        %1147 = vmatpush1.msra.mxu0 0.0
        %1148 = vmatprep.subr.mxu0 0.0
        %1149 = vmatpush1.msra.mxu0 0.0
        %1150 = vmatprep.subr.mxu0 0.0
        %1151 = vmatpush1.msra.mxu0 0.0
        %1152 = vmatprep.subr.mxu0 0.0
        %1153 = vmatpush1.msra.mxu0 0.0
        %1154 = vmatprep.mubr.f32.mxu0 0.0
        %1155 = vmatmul.mubr.f32.gmra.mrb[0].mxu0 %v1088
        %v1156 = vpop.f32.mrb[0].mxu0
        %v1157 = vadd.f32 %v1001, %v1156
        %v1158 = vpop.f32.mrb[0].mxu0
        %1159 = vdwg.mxu0
        %v1161 = vsel %vm663, %v958, 0
        %1163 = vmatprep.subr.mxu0 0.0
        %1164 = vmatpush1.msra.mxu0 %v964
        %1165 = vmatprep.subr.mxu0 0.0
        %1166 = vmatpush1.msra.mxu0 %v965
        %1167 = vmatprep.subr.mxu0 0.0
        %1168 = vmatpush1.msra.mxu0 0.0
        %1169 = vmatprep.subr.mxu0 0.0
        %1170 = vmatpush1.msra.mxu0 0.0
        %1171 = vmatprep.subr.mxu0 0.0
        %1172 = vmatpush1.msra.mxu0 0.0
        %1173 = vmatprep.subr.mxu0 0.0
        %1174 = vmatpush1.msra.mxu0 0.0
        %1175 = vmatprep.subr.mxu0 0.0
        %1176 = vmatpush1.msra.mxu0 0.0
        %1177 = vmatprep.subr.mxu0 0.0
        %1178 = vmatpush1.msra.mxu0 0.0
        %1179 = vmatprep.subr.mxu0 0.0
        %1180 = vmatpush1.msra.mxu0 0.0
        %1181 = vmatprep.subr.mxu0 0.0
        %1182 = vmatpush1.msra.mxu0 0.0
        %1183 = vmatprep.subr.mxu0 0.0
        %1184 = vmatpush1.msra.mxu0 0.0
        %1185 = vmatprep.subr.mxu0 0.0
        %1186 = vmatpush1.msra.mxu0 0.0
        %1187 = vmatprep.subr.mxu0 0.0
        %1188 = vmatpush1.msra.mxu0 0.0
        %1189 = vmatprep.subr.mxu0 0.0
        %1190 = vmatpush1.msra.mxu0 0.0
        %1191 = vmatprep.subr.mxu0 0.0
        %1192 = vmatpush1.msra.mxu0 0.0
        %1193 = vmatprep.subr.mxu0 0.0
        %1194 = vmatpush1.msra.mxu0 0.0
        %1195 = vmatprep.subr.mxu0 0.0
        %1196 = vmatpush1.msra.mxu0 0.0
        %1197 = vmatprep.subr.mxu0 0.0
        %1198 = vmatpush1.msra.mxu0 0.0
        %1199 = vmatprep.subr.mxu0 0.0
        %1200 = vmatpush1.msra.mxu0 0.0
        %1201 = vmatprep.subr.mxu0 0.0
        %1202 = vmatpush1.msra.mxu0 0.0
        %1203 = vmatprep.subr.mxu0 0.0
        %1204 = vmatpush1.msra.mxu0 0.0
        %1205 = vmatprep.subr.mxu0 0.0
        %1206 = vmatpush1.msra.mxu0 0.0
        %1207 = vmatprep.subr.mxu0 0.0
        %1208 = vmatpush1.msra.mxu0 0.0
        %1209 = vmatprep.subr.mxu0 0.0
        %1210 = vmatpush1.msra.mxu0 0.0
        %1211 = vmatprep.subr.mxu0 0.0
        %1212 = vmatpush1.msra.mxu0 0.0
        %1213 = vmatprep.subr.mxu0 0.0
        %1214 = vmatpush1.msra.mxu0 0.0
        %1215 = vmatprep.subr.mxu0 0.0
        %1216 = vmatpush1.msra.mxu0 0.0
        %1217 = vmatprep.subr.mxu0 0.0
        %1218 = vmatpush1.msra.mxu0 0.0
        %1219 = vmatprep.subr.mxu0 0.0
        %1220 = vmatpush1.msra.mxu0 0.0
        %1221 = vmatprep.subr.mxu0 0.0
        %1222 = vmatpush1.msra.mxu0 0.0
        %1223 = vmatprep.subr.mxu0 0.0
        %1224 = vmatpush1.msra.mxu0 0.0
        %1225 = vmatprep.subr.mxu0 0.0
        %1226 = vmatpush1.msra.mxu0 0.0
        %1227 = vmatprep.mubr.f32.mxu0 0.0
        %1228 = vmatmul.mubr.f32.gmra.mrb[0].mxu0 %v1161
        %v1229 = vpop.f32.mrb[0].mxu0
        %v1230 = vadd.f32 %v1005, %v1229
        %v1231 = vpop.f32.mrb[0].mxu0
        %1232 = vdwg.mxu0
        %v1234 = vsel %vm663, %v959, 0
        %1236 = vmatprep.subr.mxu0 0.0
        %1237 = vmatpush1.msra.mxu0 %v966
        %1238 = vmatprep.subr.mxu0 0.0
        %1239 = vmatpush1.msra.mxu0 %v967
        %1240 = vmatprep.subr.mxu0 0.0
        %1241 = vmatpush1.msra.mxu0 0.0
        %1242 = vmatprep.subr.mxu0 0.0
        %1243 = vmatpush1.msra.mxu0 0.0
        %1244 = vmatprep.subr.mxu0 0.0
        %1245 = vmatpush1.msra.mxu0 0.0
        %1246 = vmatprep.subr.mxu0 0.0
        %1247 = vmatpush1.msra.mxu0 0.0
        %1248 = vmatprep.subr.mxu0 0.0
        %1249 = vmatpush1.msra.mxu0 0.0
        %1250 = vmatprep.subr.mxu0 0.0
        %1251 = vmatpush1.msra.mxu0 0.0
        %1252 = vmatprep.subr.mxu0 0.0
        %1253 = vmatpush1.msra.mxu0 0.0
        %1254 = vmatprep.subr.mxu0 0.0
        %1255 = vmatpush1.msra.mxu0 0.0
        %1256 = vmatprep.subr.mxu0 0.0
        %1257 = vmatpush1.msra.mxu0 0.0
        %1258 = vmatprep.subr.mxu0 0.0
        %1259 = vmatpush1.msra.mxu0 0.0
        %1260 = vmatprep.subr.mxu0 0.0
        %1261 = vmatpush1.msra.mxu0 0.0
        %1262 = vmatprep.subr.mxu0 0.0
        %1263 = vmatpush1.msra.mxu0 0.0
        %1264 = vmatprep.subr.mxu0 0.0
        %1265 = vmatpush1.msra.mxu0 0.0
        %1266 = vmatprep.subr.mxu0 0.0
        %1267 = vmatpush1.msra.mxu0 0.0
        %1268 = vmatprep.subr.mxu0 0.0
        %1269 = vmatpush1.msra.mxu0 0.0
        %1270 = vmatprep.subr.mxu0 0.0
        %1271 = vmatpush1.msra.mxu0 0.0
        %1272 = vmatprep.subr.mxu0 0.0
        %1273 = vmatpush1.msra.mxu0 0.0
        %1274 = vmatprep.subr.mxu0 0.0
        %1275 = vmatpush1.msra.mxu0 0.0
        %1276 = vmatprep.subr.mxu0 0.0
        %1277 = vmatpush1.msra.mxu0 0.0
        %1278 = vmatprep.subr.mxu0 0.0
        %1279 = vmatpush1.msra.mxu0 0.0
        %1280 = vmatprep.subr.mxu0 0.0
        %1281 = vmatpush1.msra.mxu0 0.0
        %1282 = vmatprep.subr.mxu0 0.0
        %1283 = vmatpush1.msra.mxu0 0.0
        %1284 = vmatprep.subr.mxu0 0.0
        %1285 = vmatpush1.msra.mxu0 0.0
        %1286 = vmatprep.subr.mxu0 0.0
        %1287 = vmatpush1.msra.mxu0 0.0
        %1288 = vmatprep.subr.mxu0 0.0
        %1289 = vmatpush1.msra.mxu0 0.0
        %1290 = vmatprep.subr.mxu0 0.0
        %1291 = vmatpush1.msra.mxu0 0.0
        %1292 = vmatprep.subr.mxu0 0.0
        %1293 = vmatpush1.msra.mxu0 0.0
        %1294 = vmatprep.subr.mxu0 0.0
        %1295 = vmatpush1.msra.mxu0 0.0
        %1296 = vmatprep.subr.mxu0 0.0
        %1297 = vmatpush1.msra.mxu0 0.0
        %1298 = vmatprep.subr.mxu0 0.0
        %1299 = vmatpush1.msra.mxu0 0.0
        %1300 = vmatprep.mubr.f32.mxu0 0.0
        %1301 = vmatmul.mubr.f32.gmra.mrb[0].mxu0 %v1234
        %v1302 = vpop.f32.mrb[0].mxu0
        %v1303 = vadd.f32 %v1009, %v1302
        %v1304 = vpop.f32.mrb[0].mxu0
        %1305 = vdwg.mxu0
        %vm1306 = vcmask 31744
        %1307 = vst.msk [vmem:[%s265] sm:$0xff] %vm1306, %v1084
        %1308 = vst.msk [vmem:[%s265 + $0x8] sm:$0xff] %vm1306, %v1157
        %1309 = vst.msk [vmem:[%s265 + $0x10] sm:$0xff] %vm1306, %v1230
        %1310 = vst.msk [vmem:[%s265 + $0x18] sm:$0xff] %vm1306, %v1303
        %s1311 = sand.u32 %s178, 1
        %s1312 = sand.u32 %s178, 1
        %s1313 = smul.addr %s1312, 32
        %s1314 = scalar_lea.vmem [#allocation2], %s1313
        // Predicated region
        $region49: #{tpu_custom_call.1} parent=47 // pred_check
          %p1315 = pneg %p188
        $region50: #{tpu_custom_call.1} parent=47 // pred_check_branch
          %1317 = sbr.rel (%p1315) target = $region52
        $region51: #{tpu_custom_call.1} parent=47 // pred_region
          %s1318 = smul.addr %s18, 8
          %s1319 = scalar_lea.vmem %s7, %s1318
          // Predicated region
          $region53: #{tpu_custom_call.1} parent=51 // pred_check
            _
          $region54: #{tpu_custom_call.1} parent=51 // pred_check_branch
            %1321 = sbr.rel (0) target = $region56
          $region55: #{tpu_custom_call.1} parent=51 // pred_region
            // Predicated region
            $region57: #{tpu_custom_call.1} parent=55 // pred_check
              _
            $region58: #{tpu_custom_call.1} parent=55 // pred_check_branch
              %1323 = sbr.rel (0) target = $region60
            $region59: #{tpu_custom_call.1} parent=55 // pred_region
              // Predicated region
              $region72: #{tpu_custom_call.1} parent=59 // pred_check
                _
              $region73: #{tpu_custom_call.1} parent=59 // pred_check_branch
                %1344 = sbr.rel (0) target = $region75
              $region74: #{tpu_custom_call.1} parent=59 // pred_region
                loop: start=0, step=1, limit=1
                $region76: #{tpu_custom_call.1} parent=74 // loop_pre_header
                  _
                $region77: #{tpu_custom_call.1} parent=74 // loop_header
                  %s1346 = sphi 0, %s1350
                  %p1347 = scmp.ge.s32.totalorder %s1346, 1
                  %s1351 = sphi %s1314, %s1314
                  %s1352 = sphi %s1319, %s1319
                $region78: #{tpu_custom_call.1} parent=74 // loop_header_branch
                  %1349 = sbr.rel (%p1347) target = $region82
                $region79: #{tpu_custom_call.1} parent=74 // loop_body
                  %v1353 = vld [vmem:[%s1351] sm:$0xff]
                  %1354 = vst [vmem:[%s1352] sm:$0xff] %v1353
                  %v1355 = vld [vmem:[%s1351 + $0x8] sm:$0xff]
                  %1356 = vst [vmem:[%s1352 + $0x20] sm:$0xff] %v1355
                  %v1357 = vld [vmem:[%s1351 + $0x10] sm:$0xff]
                  %1358 = vst [vmem:[%s1352 + $0x40] sm:$0xff] %v1357
                  %v1359 = vld [vmem:[%s1351 + $0x18] sm:$0xff]
                  %1360 = vst [vmem:[%s1352 + $0x60] sm:$0xff] %v1359
                $region80: #{tpu_custom_call.1} parent=74 // loop_footer
                  %s1350 = sadd.s32 1, %s1346
                $region81: #{tpu_custom_call.1} parent=74 // loop_footer_branch
                  %1345 = sbr.rel target = $region77
                $region82: #{tpu_custom_call.1} parent=74 // loop_exit
                  _
              $region75: #{tpu_custom_call.1} parent=59 // pred_fallthru
                _
              // Predicated region
              $region83: #{tpu_custom_call.1} parent=59 // pred_check
                _
              $region84: #{tpu_custom_call.1} parent=59 // pred_check_branch
                %1362 = sbr.rel target = $region86
              $region85: #{tpu_custom_call.1} parent=59 // pred_region
                _
              $region86: #{tpu_custom_call.1} parent=59 // pred_fallthru
                _
            $region60: #{tpu_custom_call.1} parent=55 // pred_fallthru
              _
            // Predicated region
            $region61: #{tpu_custom_call.1} parent=55 // pred_check
              _
            $region62: #{tpu_custom_call.1} parent=55 // pred_check_branch
              %1325 = sbr.rel target = $region64
            $region63: #{tpu_custom_call.1} parent=55 // pred_region
              loop: start=0, step=1, limit=1
              $region65: #{tpu_custom_call.1} parent=63 // loop_pre_header
                _
              $region66: #{tpu_custom_call.1} parent=63 // loop_header
                %s1328 = sphi 0, %s1332
                %p1329 = scmp.ge.s32.totalorder %s1328, 1
                %s1333 = sphi %s1314, %s1314
                %s1334 = sphi %s1319, %s1319
              $region67: #{tpu_custom_call.1} parent=63 // loop_header_branch
                %1331 = sbr.rel (%p1329) target = $region71
              $region68: #{tpu_custom_call.1} parent=63 // loop_body
                %v1335 = vld [vmem:[%s1333] sm:$0xff]
                %1336 = vst [vmem:[%s1334] sm:$0xff] %v1335
                %v1337 = vld [vmem:[%s1333 + $0x8] sm:$0xff]
                %1338 = vst [vmem:[%s1334 + $0x20] sm:$0xff] %v1337
                %v1339 = vld [vmem:[%s1333 + $0x10] sm:$0xff]
                %1340 = vst [vmem:[%s1334 + $0x40] sm:$0xff] %v1339
                %v1341 = vld [vmem:[%s1333 + $0x18] sm:$0xff]
                %1342 = vst [vmem:[%s1334 + $0x60] sm:$0xff] %v1341
              $region69: #{tpu_custom_call.1} parent=63 // loop_footer
                %s1332 = sadd.s32 1, %s1328
              $region70: #{tpu_custom_call.1} parent=63 // loop_footer_branch
                %1327 = sbr.rel target = $region66
              $region71: #{tpu_custom_call.1} parent=63 // loop_exit
                _
            $region64: #{tpu_custom_call.1} parent=55 // pred_fallthru
              _
          $region56: #{tpu_custom_call.1} parent=51 // pred_fallthru
            _
          %1363 = vnop
        $region52: #{tpu_custom_call.1} parent=47 // pred_fallthru
          _
      $region48: #{tpu_custom_call.1} parent=5 // pred_fallthru
        _
      %p1364 = scmp.le.s32.totalorder 2, %s13
      // Predicated region
      $region87: #{tpu_custom_call.1} parent=5 // pred_check
        %p1365 = pneg %p1364
      $region88: #{tpu_custom_call.1} parent=5 // pred_check_branch
        %1367 = sbr.rel (%p1365) target = $region90
      $region89: #{tpu_custom_call.1} parent=5 // pred_region
        %s1368 = ssub.s32 %s13, 2
        // Predicated region
        $region91: #{tpu_custom_call.1} parent=89 // pred_check
          %p1369 = pneg %p194
        $region92: #{tpu_custom_call.1} parent=89 // pred_check_branch
          %1371 = sbr.rel (%p1369) target = $region94
        $region93: #{tpu_custom_call.1} parent=89 // pred_region
          %s1372 = sand.u32 %s179, 1
          %s1373 = sand.u32 %s179, 1
          %s1374 = smul.addr %s1373, 32
          %s1375 = scalar_lea.vmem [#allocation2], %s1374
        $region94: #{tpu_custom_call.1} parent=89 // pred_fallthru
          _
      $region90: #{tpu_custom_call.1} parent=5 // pred_fallthru
        _
    $region6: #{tpu_custom_call.1} parent=1 // loop_footer
      %s17 = sadd.s32 1, %s13
    $region7: #{tpu_custom_call.1} parent=1 // loop_footer_branch
      %12 = sbr.rel target = $region3
    $region8: #{tpu_custom_call.1} parent=1 // loop_exit
      _

</llo_original>
